<compile_context>
chip_gen: v5e
topology: v5e:2x2
jax: 0.10.0
libtpu: 0.0.40
codegen_flags: <defaults>
</compile_context>

<pallas_src>
import functools

import jax
import jax.numpy as jnp
from jax import lax
from jax.experimental import pallas as pl
from jax.experimental.pallas import tpu as pltpu


def _rnn_kernel(num_layers, seq_len, batch_p, out_size, x_ref, *refs):
    # refs: [w_ih_T, w_hh_T, bias]*num_layers, w_cls_T, b_cls, out_ref, seq_scratch
    layer_refs = refs[:3 * num_layers]
    w_cls_ref, b_cls_ref, out_ref, seq_ref = refs[3 * num_layers:]

    T, BP = seq_len, batch_p
    H = layer_refs[1].shape[0]

    h_last = None
    for layer in range(num_layers):
        w_ih = layer_refs[3 * layer][...].astype(jnp.bfloat16)      # (D_in, H)
        w_hh = layer_refs[3 * layer + 1][...].astype(jnp.bfloat16)  # (H, H)
        b = layer_refs[3 * layer + 2][...]                          # (1, H) f32

        # Hoisted input projection (+ bias fold): one MXU matmul per layer.
        inp = x_ref[...] if layer == 0 else seq_ref[...]            # (T*BP, D_in)
        proj = jnp.dot(inp.astype(jnp.bfloat16), w_ih,
                       preferred_element_type=jnp.float32) + b      # (T*BP, H)
        seq_ref[...] = proj

        last_layer = (layer == num_layers - 1)

        def step(t, h, _w_hh=w_hh, _store=not last_layer):
            row = pl.multiple_of(t * BP, BP)
            p_t = seq_ref[pl.ds(row, BP), :]                        # (BP, H) f32
            h_new = jnp.tanh(
                p_t + jnp.dot(h.astype(jnp.bfloat16), _w_hh,
                              preferred_element_type=jnp.float32))
            if _store:  # next layer's projection needs the full sequence
                seq_ref[pl.ds(row, BP), :] = h_new
            return h_new

        h_last = lax.fori_loop(0, T, step,
                               jnp.zeros((BP, H), jnp.float32),
                               unroll=T <= 16)
        # TODO(synk): PyTorch applies inter-layer dropout only in training
        # mode; this kernel matches eval-mode semantics (no dropout).

    # Classifier on the last timestep: Linear -> ReLU -> Softmax.
    # TODO(synk): the reference uses nn.Softmax(output_size) (invalid dim);
    # we softmax over the feature (last) axis, which is the evident intent.
    logits = (jnp.dot(h_last.astype(jnp.bfloat16),
                      w_cls_ref[...].astype(jnp.bfloat16),
                      preferred_element_type=jnp.float32)
              + b_cls_ref[...])                                     # (BP, O_pad)
    act = jnp.maximum(logits, 0.0)
    # Mask lane padding so padded lanes get exactly zero probability.
    col = lax.broadcasted_iota(jnp.int32, act.shape, 1)
    act = jnp.where(col < out_size, act, jnp.float32(-1e30))
    m = jnp.max(act, axis=-1, keepdims=True)
    e = jnp.exp(act - m)
    probs = e * pl.reciprocal(jnp.sum(e, axis=-1, keepdims=True), approx=True)
    out_ref[...] = probs.astype(out_ref.dtype)


def rnn_forward(x, params, num_layers):
    """x: (B, T, D) float32, batch-first. Returns (B, O) softmax probs."""
    B, T, D = x.shape
    H = params["w_hh_0"].shape[0]
    O = params["w_cls"].shape[0]

    BP = max(8, -(-B // 8) * 8)           # pad batch to a sublane multiple
    OP = max(128, -(-O // 128) * 128)     # lane-dense classifier output width

    # Time-major + batch-pad + flatten: (B,T,D) -> (T*BP, D). Layout plumbing
    # done in the wrapper, not in the kernel.
    x_tm = jnp.transpose(x, (1, 0, 2))                     # (T, B, D)
    x_tm = jnp.pad(x_tm, ((0, 0), (0, BP - B), (0, 0)))    # (T, BP, D)
    x_flat = x_tm.reshape(T * BP, D)

    flat_w = []
    for l in range(num_layers):
        flat_w.append(params[f"w_ih_{l}"].T)                              # (D_in, H)
        flat_w.append(params[f"w_hh_{l}"].T)                              # (H, H)
        flat_w.append((params[f"b_ih_{l}"] + params[f"b_hh_{l}"]).reshape(1, -1))
    w_cls_t = jnp.pad(params["w_cls"].T, ((0, 0), (0, OP - O)))           # (H, OP)
    b_cls = jnp.pad(params["b_cls"].reshape(1, -1), ((0, 0), (0, OP - O)))

    # Advisory cost estimate for XLA scheduling.
    flops, d_in = 0, D
    for _ in range(num_layers):
        flops += 2 * T * BP * d_in * H + 2 * T * BP * H * H
        d_in = H
    flops += 2 * BP * H * OP
    transcendentals = num_layers * T * BP * H + BP * OP
    bytes_accessed = 4 * (int(x_flat.size) + sum(int(w.size) for w in flat_w)
                          + int(w_cls_t.size) + int(b_cls.size) + BP * OP)

    n_inputs = 1 + len(flat_w) + 2
    kernel = functools.partial(_rnn_kernel, num_layers, T, BP, O)
    out_padded = pl.pallas_call(
        kernel,
        out_shape=jax.ShapeDtypeStruct((BP, OP), jnp.float32),
        in_specs=[pl.BlockSpec(memory_space=pltpu.MemorySpace.VMEM)] * n_inputs,
        out_specs=pl.BlockSpec(memory_space=pltpu.MemorySpace.VMEM),
        scratch_shapes=[pltpu.VMEM((T * BP, H), jnp.float32)],
        compiler_params=pltpu.CompilerParams(vmem_limit_bytes=32 * 1024 * 1024),
        cost_estimate=pl.CostEstimate(flops=flops,
                                      transcendentals=transcendentals,
                                      bytes_accessed=bytes_accessed),
    )(x_flat, *flat_w, w_cls_t, b_cls)
    # TODO(synk): for large B (esp. on v7x: 2 TCs, 64 MiB VMEM) add a parallel
    # batch grid axis instead of a single resident block.
    return out_padded[:B, :O]


def init_params(key, d_model, hidden_size, num_layers, output_size):
    """Deterministic init mirroring PyTorch's U(-1/sqrt(H), 1/sqrt(H))."""
    params = {}
    k_rnn = 1.0 / jnp.sqrt(hidden_size)
    for l in range(num_layers):
        d_in = d_model if l == 0 else hidden_size
        key, k1, k2, k3, k4 = jax.random.split(key, 5)
        params[f"w_ih_{l}"] = jax.random.uniform(k1, (hidden_size, d_in),
                                                 jnp.float32, -k_rnn, k_rnn)
        params[f"w_hh_{l}"] = jax.random.uniform(k2, (hidden_size, hidden_size),
                                                 jnp.float32, -k_rnn, k_rnn)
        params[f"b_ih_{l}"] = jax.random.uniform(k3, (hidden_size,),
                                                 jnp.float32, -k_rnn, k_rnn)
        params[f"b_hh_{l}"] = jax.random.uniform(k4, (hidden_size,),
                                                 jnp.float32, -k_rnn, k_rnn)
    key, k1, k2 = jax.random.split(key, 3)
    k_lin = 1.0 / jnp.sqrt(hidden_size)
    params["w_cls"] = jax.random.uniform(k1, (output_size, hidden_size),
                                         jnp.float32, -k_lin, k_lin)
    params["b_cls"] = jax.random.uniform(k2, (output_size,),
                                         jnp.float32, -k_lin, k_lin)
    return params


if __name__ == "__main__":
    d_model, hidden_size, num_layers, output_size = 16, 32, 2, 8
    batch, seq = 2, 8

    key = jax.random.PRNGKey(0)
    key, kx, kp = jax.random.split(key, 3)
    x = jax.random.normal(kx, (batch, seq, d_model), jnp.float32)
    params = init_params(kp, d_model, hidden_size, num_layers, output_size)

    out = rnn_forward(x, params, num_layers)
    out = jax.block_until_ready(out)
    assert out.shape == (batch, output_size)
    # softmax rows sum to ~1 (approx reciprocal has ~2^-12 relative error)
    assert bool(jnp.allclose(jnp.sum(out, axis=-1), 1.0, atol=2e-3))
    assert bool(jnp.all(out >= 0.0))
    print("KERNEL_OK")
</pallas_src>

<mosaic_0001>
module attributes {stable_mosaic.version = 11 : i64} {
  func.func @_rnn_kernel(%arg0: memref<64x16xf32, #tpu.memory_space<vmem>>, %arg1: memref<16x32xf32, #tpu.memory_space<vmem>>, %arg2: memref<32x32xf32, #tpu.memory_space<vmem>>, %arg3: memref<1x32xf32, #tpu.memory_space<vmem>>, %arg4: memref<32x32xf32, #tpu.memory_space<vmem>>, %arg5: memref<32x32xf32, #tpu.memory_space<vmem>>, %arg6: memref<1x32xf32, #tpu.memory_space<vmem>>, %arg7: memref<32x128xf32, #tpu.memory_space<vmem>>, %arg8: memref<1x128xf32, #tpu.memory_space<vmem>>, %arg9: memref<8x128xf32, #tpu.memory_space<vmem>>, %arg10: memref<64x32xf32, #tpu.memory_space<vmem>>) attributes {dimension_semantics = [], scalar_prefetch = 0 : i64, scratch_operands = 1 : i64, tpu.core_type = #tpu.core_type<tc>} {
    %c0 = arith.constant 0 : index
    %c0_0 = arith.constant 0 : index
    %0 = vector.load %arg1[%c0, %c0_0] : memref<16x32xf32, #tpu.memory_space<vmem>>, vector<16x32xf32>
    %1 = arith.truncf %0 : vector<16x32xf32> to vector<16x32xbf16>
    %c0_1 = arith.constant 0 : index
    %c0_2 = arith.constant 0 : index
    %2 = vector.load %arg2[%c0_1, %c0_2] : memref<32x32xf32, #tpu.memory_space<vmem>>, vector<32x32xf32>
    %3 = arith.truncf %2 : vector<32x32xf32> to vector<32x32xbf16>
    %c0_3 = arith.constant 0 : index
    %c0_4 = arith.constant 0 : index
    %4 = vector.load %arg3[%c0_3, %c0_4] : memref<1x32xf32, #tpu.memory_space<vmem>>, vector<1x32xf32>
    %c0_5 = arith.constant 0 : index
    %c0_6 = arith.constant 0 : index
    %5 = vector.load %arg0[%c0_5, %c0_6] : memref<64x16xf32, #tpu.memory_space<vmem>>, vector<64x16xf32>
    %6 = arith.truncf %5 : vector<64x16xf32> to vector<64x16xbf16>
    %cst = arith.constant dense<0.000000e+00> : vector<64x32xf32>
    %7 = tpu.matmul %6, %1, %cst {dimension_numbers = #tpu.dot_dimension_numbers<[1], [0], [0], [1], [0, 0, 1, 1], [], []>} : vector<64x16xbf16>, vector<16x32xbf16>, vector<64x32xf32> -> vector<64x32xf32>
    %8 = vector.broadcast %4 : vector<1x32xf32> to vector<64x32xf32>
    %9 = arith.addf %7, %8 : vector<64x32xf32>
    %c0_7 = arith.constant 0 : index
    %c0_8 = arith.constant 0 : index
    %10 = vector.load %arg10[%c0_7, %c0_8] : memref<64x32xf32, #tpu.memory_space<vmem>>, vector<64x32xf32>
    tpu.vector_store %arg10[%c0_7, %c0_8], %9 {strides = array<i32>} : memref<64x32xf32, #tpu.memory_space<vmem>>, vector<64x32xf32>,
    %cst_9 = arith.constant 0.000000e+00 : f32
    %11 = vector.broadcast %cst_9 : f32 to vector<8x32xf32>
    %c0_i32 = arith.constant 0 : i32
    %c8_i32 = arith.constant 8 : i32
    %12 = arith.muli %c0_i32, %c8_i32 : i32
    %13 = tpu.assume_multiple %12, 8 : i32
    %14 = arith.index_cast %13 : i32 to index
    %c0_10 = arith.constant 0 : index
    %15 = vector.load %arg10[%14, %c0_10] : memref<64x32xf32, #tpu.memory_space<vmem>>, vector<8x32xf32>
    %16 = arith.truncf %11 : vector<8x32xf32> to vector<8x32xbf16>
    %cst_11 = arith.constant dense<0.000000e+00> : vector<8x32xf32>
    %17 = tpu.matmul %16, %3, %cst_11 {dimension_numbers = #tpu.dot_dimension_numbers<[1], [0], [0], [1], [0, 0, 1, 1], [], []>} : vector<8x32xbf16>, vector<32x32xbf16>, vector<8x32xf32> -> vector<8x32xf32>
    %18 = arith.addf %15, %17 : vector<8x32xf32>
    %19 = math.tanh %18 : vector<8x32xf32>
    %20 = arith.index_cast %13 : i32 to index
    %c0_12 = arith.constant 0 : index
    %21 = vector.load %arg10[%20, %c0_12] : memref<64x32xf32, #tpu.memory_space<vmem>>, vector<8x32xf32>
    tpu.vector_store %arg10[%20, %c0_12], %19 {strides = array<i32>} : memref<64x32xf32, #tpu.memory_space<vmem>>, vector<8x32xf32>,
    %c1_i32 = arith.constant 1 : i32
    %c8_i32_13 = arith.constant 8 : i32
    %22 = arith.muli %c1_i32, %c8_i32_13 : i32
    %23 = tpu.assume_multiple %22, 8 : i32
    %24 = arith.index_cast %23 : i32 to index
    %c0_14 = arith.constant 0 : index
    %25 = vector.load %arg10[%24, %c0_14] : memref<64x32xf32, #tpu.memory_space<vmem>>, vector<8x32xf32>
    %26 = arith.truncf %19 : vector<8x32xf32> to vector<8x32xbf16>
    %cst_15 = arith.constant dense<0.000000e+00> : vector<8x32xf32>
    %27 = tpu.matmul %26, %3, %cst_15 {dimension_numbers = #tpu.dot_dimension_numbers<[1], [0], [0], [1], [0, 0, 1, 1], [], []>} : vector<8x32xbf16>, vector<32x32xbf16>, vector<8x32xf32> -> vector<8x32xf32>
    %28 = arith.addf %25, %27 : vector<8x32xf32>
    %29 = math.tanh %28 : vector<8x32xf32>
    %30 = arith.index_cast %23 : i32 to index
    %c0_16 = arith.constant 0 : index
    %31 = vector.load %arg10[%30, %c0_16] : memref<64x32xf32, #tpu.memory_space<vmem>>, vector<8x32xf32>
    tpu.vector_store %arg10[%30, %c0_16], %29 {strides = array<i32>} : memref<64x32xf32, #tpu.memory_space<vmem>>, vector<8x32xf32>,
    %c2_i32 = arith.constant 2 : i32
    %c8_i32_17 = arith.constant 8 : i32
    %32 = arith.muli %c2_i32, %c8_i32_17 : i32
    %33 = tpu.assume_multiple %32, 8 : i32
    %34 = arith.index_cast %33 : i32 to index
    %c0_18 = arith.constant 0 : index
    %35 = vector.load %arg10[%34, %c0_18] : memref<64x32xf32, #tpu.memory_space<vmem>>, vector<8x32xf32>
    %36 = arith.truncf %29 : vector<8x32xf32> to vector<8x32xbf16>
    %cst_19 = arith.constant dense<0.000000e+00> : vector<8x32xf32>
    %37 = tpu.matmul %36, %3, %cst_19 {dimension_numbers = #tpu.dot_dimension_numbers<[1], [0], [0], [1], [0, 0, 1, 1], [], []>} : vector<8x32xbf16>, vector<32x32xbf16>, vector<8x32xf32> -> vector<8x32xf32>
    %38 = arith.addf %35, %37 : vector<8x32xf32>
    %39 = math.tanh %38 : vector<8x32xf32>
    %40 = arith.index_cast %33 : i32 to index
    %c0_20 = arith.constant 0 : index
    %41 = vector.load %arg10[%40, %c0_20] : memref<64x32xf32, #tpu.memory_space<vmem>>, vector<8x32xf32>
    tpu.vector_store %arg10[%40, %c0_20], %39 {strides = array<i32>} : memref<64x32xf32, #tpu.memory_space<vmem>>, vector<8x32xf32>,
    %c3_i32 = arith.constant 3 : i32
    %c8_i32_21 = arith.constant 8 : i32
    %42 = arith.muli %c3_i32, %c8_i32_21 : i32
    %43 = tpu.assume_multiple %42, 8 : i32
    %44 = arith.index_cast %43 : i32 to index
    %c0_22 = arith.constant 0 : index
    %45 = vector.load %arg10[%44, %c0_22] : memref<64x32xf32, #tpu.memory_space<vmem>>, vector<8x32xf32>
    %46 = arith.truncf %39 : vector<8x32xf32> to vector<8x32xbf16>
    %cst_23 = arith.constant dense<0.000000e+00> : vector<8x32xf32>
    %47 = tpu.matmul %46, %3, %cst_23 {dimension_numbers = #tpu.dot_dimension_numbers<[1], [0], [0], [1], [0, 0, 1, 1], [], []>} : vector<8x32xbf16>, vector<32x32xbf16>, vector<8x32xf32> -> vector<8x32xf32>
    %48 = arith.addf %45, %47 : vector<8x32xf32>
    %49 = math.tanh %48 : vector<8x32xf32>
    %50 = arith.index_cast %43 : i32 to index
    %c0_24 = arith.constant 0 : index
    %51 = vector.load %arg10[%50, %c0_24] : memref<64x32xf32, #tpu.memory_space<vmem>>, vector<8x32xf32>
    tpu.vector_store %arg10[%50, %c0_24], %49 {strides = array<i32>} : memref<64x32xf32, #tpu.memory_space<vmem>>, vector<8x32xf32>,
    %c4_i32 = arith.constant 4 : i32
    %c8_i32_25 = arith.constant 8 : i32
    %52 = arith.muli %c4_i32, %c8_i32_25 : i32
    %53 = tpu.assume_multiple %52, 8 : i32
    %54 = arith.index_cast %53 : i32 to index
    %c0_26 = arith.constant 0 : index
    %55 = vector.load %arg10[%54, %c0_26] : memref<64x32xf32, #tpu.memory_space<vmem>>, vector<8x32xf32>
    %56 = arith.truncf %49 : vector<8x32xf32> to vector<8x32xbf16>
    %cst_27 = arith.constant dense<0.000000e+00> : vector<8x32xf32>
    %57 = tpu.matmul %56, %3, %cst_27 {dimension_numbers = #tpu.dot_dimension_numbers<[1], [0], [0], [1], [0, 0, 1, 1], [], []>} : vector<8x32xbf16>, vector<32x32xbf16>, vector<8x32xf32> -> vector<8x32xf32>
    %58 = arith.addf %55, %57 : vector<8x32xf32>
    %59 = math.tanh %58 : vector<8x32xf32>
    %60 = arith.index_cast %53 : i32 to index
    %c0_28 = arith.constant 0 : index
    %61 = vector.load %arg10[%60, %c0_28] : memref<64x32xf32, #tpu.memory_space<vmem>>, vector<8x32xf32>
    tpu.vector_store %arg10[%60, %c0_28], %59 {strides = array<i32>} : memref<64x32xf32, #tpu.memory_space<vmem>>, vector<8x32xf32>,
    %c5_i32 = arith.constant 5 : i32
    %c8_i32_29 = arith.constant 8 : i32
    %62 = arith.muli %c5_i32, %c8_i32_29 : i32
    %63 = tpu.assume_multiple %62, 8 : i32
    %64 = arith.index_cast %63 : i32 to index
    %c0_30 = arith.constant 0 : index
    %65 = vector.load %arg10[%64, %c0_30] : memref<64x32xf32, #tpu.memory_space<vmem>>, vector<8x32xf32>
    %66 = arith.truncf %59 : vector<8x32xf32> to vector<8x32xbf16>
    %cst_31 = arith.constant dense<0.000000e+00> : vector<8x32xf32>
    %67 = tpu.matmul %66, %3, %cst_31 {dimension_numbers = #tpu.dot_dimension_numbers<[1], [0], [0], [1], [0, 0, 1, 1], [], []>} : vector<8x32xbf16>, vector<32x32xbf16>, vector<8x32xf32> -> vector<8x32xf32>
    %68 = arith.addf %65, %67 : vector<8x32xf32>
    %69 = math.tanh %68 : vector<8x32xf32>
    %70 = arith.index_cast %63 : i32 to index
    %c0_32 = arith.constant 0 : index
    %71 = vector.load %arg10[%70, %c0_32] : memref<64x32xf32, #tpu.memory_space<vmem>>, vector<8x32xf32>
    tpu.vector_store %arg10[%70, %c0_32], %69 {strides = array<i32>} : memref<64x32xf32, #tpu.memory_space<vmem>>, vector<8x32xf32>,
    %c6_i32 = arith.constant 6 : i32
    %c8_i32_33 = arith.constant 8 : i32
    %72 = arith.muli %c6_i32, %c8_i32_33 : i32
    %73 = tpu.assume_multiple %72, 8 : i32
    %74 = arith.index_cast %73 : i32 to index
    %c0_34 = arith.constant 0 : index
    %75 = vector.load %arg10[%74, %c0_34] : memref<64x32xf32, #tpu.memory_space<vmem>>, vector<8x32xf32>
    %76 = arith.truncf %69 : vector<8x32xf32> to vector<8x32xbf16>
    %cst_35 = arith.constant dense<0.000000e+00> : vector<8x32xf32>
    %77 = tpu.matmul %76, %3, %cst_35 {dimension_numbers = #tpu.dot_dimension_numbers<[1], [0], [0], [1], [0, 0, 1, 1], [], []>} : vector<8x32xbf16>, vector<32x32xbf16>, vector<8x32xf32> -> vector<8x32xf32>
    %78 = arith.addf %75, %77 : vector<8x32xf32>
    %79 = math.tanh %78 : vector<8x32xf32>
    %80 = arith.index_cast %73 : i32 to index
    %c0_36 = arith.constant 0 : index
    %81 = vector.load %arg10[%80, %c0_36] : memref<64x32xf32, #tpu.memory_space<vmem>>, vector<8x32xf32>
    tpu.vector_store %arg10[%80, %c0_36], %79 {strides = array<i32>} : memref<64x32xf32, #tpu.memory_space<vmem>>, vector<8x32xf32>,
    %c7_i32 = arith.constant 7 : i32
    %c8_i32_37 = arith.constant 8 : i32
    %82 = arith.muli %c7_i32, %c8_i32_37 : i32
    %83 = tpu.assume_multiple %82, 8 : i32
    %84 = arith.index_cast %83 : i32 to index
    %c0_38 = arith.constant 0 : index
    %85 = vector.load %arg10[%84, %c0_38] : memref<64x32xf32, #tpu.memory_space<vmem>>, vector<8x32xf32>
    %86 = arith.truncf %79 : vector<8x32xf32> to vector<8x32xbf16>
    %cst_39 = arith.constant dense<0.000000e+00> : vector<8x32xf32>
    %87 = tpu.matmul %86, %3, %cst_39 {dimension_numbers = #tpu.dot_dimension_numbers<[1], [0], [0], [1], [0, 0, 1, 1], [], []>} : vector<8x32xbf16>, vector<32x32xbf16>, vector<8x32xf32> -> vector<8x32xf32>
    %88 = arith.addf %85, %87 : vector<8x32xf32>
    %89 = math.tanh %88 : vector<8x32xf32>
    %90 = arith.index_cast %83 : i32 to index
    %c0_40 = arith.constant 0 : index
    %91 = vector.load %arg10[%90, %c0_40] : memref<64x32xf32, #tpu.memory_space<vmem>>, vector<8x32xf32>
    tpu.vector_store %arg10[%90, %c0_40], %89 {strides = array<i32>} : memref<64x32xf32, #tpu.memory_space<vmem>>, vector<8x32xf32>,
    %c8_i32_41 = arith.constant 8 : i32
    %c0_42 = arith.constant 0 : index
    %c0_43 = arith.constant 0 : index
    %92 = vector.load %arg4[%c0_42, %c0_43] : memref<32x32xf32, #tpu.memory_space<vmem>>, vector<32x32xf32>
    %93 = arith.truncf %92 : vector<32x32xf32> to vector<32x32xbf16>
    %c0_44 = arith.constant 0 : index
    %c0_45 = arith.constant 0 : index
    %94 = vector.load %arg5[%c0_44, %c0_45] : memref<32x32xf32, #tpu.memory_space<vmem>>, vector<32x32xf32>
    %95 = arith.truncf %94 : vector<32x32xf32> to vector<32x32xbf16>
    %c0_46 = arith.constant 0 : index
    %c0_47 = arith.constant 0 : index
    %96 = vector.load %arg6[%c0_46, %c0_47] : memref<1x32xf32, #tpu.memory_space<vmem>>, vector<1x32xf32>
    %c0_48 = arith.constant 0 : index
    %c0_49 = arith.constant 0 : index
    %97 = vector.load %arg10[%c0_48, %c0_49] : memref<64x32xf32, #tpu.memory_space<vmem>>, vector<64x32xf32>
    %98 = arith.truncf %97 : vector<64x32xf32> to vector<64x32xbf16>
    %cst_50 = arith.constant dense<0.000000e+00> : vector<64x32xf32>
    %99 = tpu.matmul %98, %93, %cst_50 {dimension_numbers = #tpu.dot_dimension_numbers<[1], [0], [0], [1], [0, 0, 1, 1], [], []>} : vector<64x32xbf16>, vector<32x32xbf16>, vector<64x32xf32> -> vector<64x32xf32>
    %100 = vector.broadcast %96 : vector<1x32xf32> to vector<64x32xf32>
    %101 = arith.addf %99, %100 : vector<64x32xf32>
    %c0_51 = arith.constant 0 : index
    %c0_52 = arith.constant 0 : index
    %102 = vector.load %arg10[%c0_51, %c0_52] : memref<64x32xf32, #tpu.memory_space<vmem>>, vector<64x32xf32>
    tpu.vector_store %arg10[%c0_51, %c0_52], %101 {strides = array<i32>} : memref<64x32xf32, #tpu.memory_space<vmem>>, vector<64x32xf32>,
    %cst_53 = arith.constant 0.000000e+00 : f32
    %103 = vector.broadcast %cst_53 : f32 to vector<8x32xf32>
    %c0_i32_54 = arith.constant 0 : i32
    %c8_i32_55 = arith.constant 8 : i32
    %104 = arith.muli %c0_i32_54, %c8_i32_55 : i32
    %105 = tpu.assume_multiple %104, 8 : i32
    %106 = arith.index_cast %105 : i32 to index
    %c0_56 = arith.constant 0 : index
    %107 = vector.load %arg10[%106, %c0_56] : memref<64x32xf32, #tpu.memory_space<vmem>>, vector<8x32xf32>
    %108 = arith.truncf %103 : vector<8x32xf32> to vector<8x32xbf16>
    %cst_57 = arith.constant dense<0.000000e+00> : vector<8x32xf32>
    %109 = tpu.matmul %108, %95, %cst_57 {dimension_numbers = #tpu.dot_dimension_numbers<[1], [0], [0], [1], [0, 0, 1, 1], [], []>} : vector<8x32xbf16>, vector<32x32xbf16>, vector<8x32xf32> -> vector<8x32xf32>
    %110 = arith.addf %107, %109 : vector<8x32xf32>
    %111 = math.tanh %110 : vector<8x32xf32>
    %c1_i32_58 = arith.constant 1 : i32
    %c8_i32_59 = arith.constant 8 : i32
    %112 = arith.muli %c1_i32_58, %c8_i32_59 : i32
    %113 = tpu.assume_multiple %112, 8 : i32
    %114 = arith.index_cast %113 : i32 to index
    %c0_60 = arith.constant 0 : index
    %115 = vector.load %arg10[%114, %c0_60] : memref<64x32xf32, #tpu.memory_space<vmem>>, vector<8x32xf32>
    %116 = arith.truncf %111 : vector<8x32xf32> to vector<8x32xbf16>
    %cst_61 = arith.constant dense<0.000000e+00> : vector<8x32xf32>
    %117 = tpu.matmul %116, %95, %cst_61 {dimension_numbers = #tpu.dot_dimension_numbers<[1], [0], [0], [1], [0, 0, 1, 1], [], []>} : vector<8x32xbf16>, vector<32x32xbf16>, vector<8x32xf32> -> vector<8x32xf32>
    %118 = arith.addf %115, %117 : vector<8x32xf32>
    %119 = math.tanh %118 : vector<8x32xf32>
    %c2_i32_62 = arith.constant 2 : i32
    %c8_i32_63 = arith.constant 8 : i32
    %120 = arith.muli %c2_i32_62, %c8_i32_63 : i32
    %121 = tpu.assume_multiple %120, 8 : i32
    %122 = arith.index_cast %121 : i32 to index
    %c0_64 = arith.constant 0 : index
    %123 = vector.load %arg10[%122, %c0_64] : memref<64x32xf32, #tpu.memory_space<vmem>>, vector<8x32xf32>
    %124 = arith.truncf %119 : vector<8x32xf32> to vector<8x32xbf16>
    %cst_65 = arith.constant dense<0.000000e+00> : vector<8x32xf32>
    %125 = tpu.matmul %124, %95, %cst_65 {dimension_numbers = #tpu.dot_dimension_numbers<[1], [0], [0], [1], [0, 0, 1, 1], [], []>} : vector<8x32xbf16>, vector<32x32xbf16>, vector<8x32xf32> -> vector<8x32xf32>
    %126 = arith.addf %123, %125 : vector<8x32xf32>
    %127 = math.tanh %126 : vector<8x32xf32>
    %c3_i32_66 = arith.constant 3 : i32
    %c8_i32_67 = arith.constant 8 : i32
    %128 = arith.muli %c3_i32_66, %c8_i32_67 : i32
    %129 = tpu.assume_multiple %128, 8 : i32
    %130 = arith.index_cast %129 : i32 to index
    %c0_68 = arith.constant 0 : index
    %131 = vector.load %arg10[%130, %c0_68] : memref<64x32xf32, #tpu.memory_space<vmem>>, vector<8x32xf32>
    %132 = arith.truncf %127 : vector<8x32xf32> to vector<8x32xbf16>
    %cst_69 = arith.constant dense<0.000000e+00> : vector<8x32xf32>
    %133 = tpu.matmul %132, %95, %cst_69 {dimension_numbers = #tpu.dot_dimension_numbers<[1], [0], [0], [1], [0, 0, 1, 1], [], []>} : vector<8x32xbf16>, vector<32x32xbf16>, vector<8x32xf32> -> vector<8x32xf32>
    %134 = arith.addf %131, %133 : vector<8x32xf32>
    %135 = math.tanh %134 : vector<8x32xf32>
    %c4_i32_70 = arith.constant 4 : i32
    %c8_i32_71 = arith.constant 8 : i32
    %136 = arith.muli %c4_i32_70, %c8_i32_71 : i32
    %137 = tpu.assume_multiple %136, 8 : i32
    %138 = arith.index_cast %137 : i32 to index
    %c0_72 = arith.constant 0 : index
    %139 = vector.load %arg10[%138, %c0_72] : memref<64x32xf32, #tpu.memory_space<vmem>>, vector<8x32xf32>
    %140 = arith.truncf %135 : vector<8x32xf32> to vector<8x32xbf16>
    %cst_73 = arith.constant dense<0.000000e+00> : vector<8x32xf32>
    %141 = tpu.matmul %140, %95, %cst_73 {dimension_numbers = #tpu.dot_dimension_numbers<[1], [0], [0], [1], [0, 0, 1, 1], [], []>} : vector<8x32xbf16>, vector<32x32xbf16>, vector<8x32xf32> -> vector<8x32xf32>
    %142 = arith.addf %139, %141 : vector<8x32xf32>
    %143 = math.tanh %142 : vector<8x32xf32>
    %c5_i32_74 = arith.constant 5 : i32
    %c8_i32_75 = arith.constant 8 : i32
    %144 = arith.muli %c5_i32_74, %c8_i32_75 : i32
    %145 = tpu.assume_multiple %144, 8 : i32
    %146 = arith.index_cast %145 : i32 to index
    %c0_76 = arith.constant 0 : index
    %147 = vector.load %arg10[%146, %c0_76] : memref<64x32xf32, #tpu.memory_space<vmem>>, vector<8x32xf32>
    %148 = arith.truncf %143 : vector<8x32xf32> to vector<8x32xbf16>
    %cst_77 = arith.constant dense<0.000000e+00> : vector<8x32xf32>
    %149 = tpu.matmul %148, %95, %cst_77 {dimension_numbers = #tpu.dot_dimension_numbers<[1], [0], [0], [1], [0, 0, 1, 1], [], []>} : vector<8x32xbf16>, vector<32x32xbf16>, vector<8x32xf32> -> vector<8x32xf32>
    %150 = arith.addf %147, %149 : vector<8x32xf32>
    %151 = math.tanh %150 : vector<8x32xf32>
    %c6_i32_78 = arith.constant 6 : i32
    %c8_i32_79 = arith.constant 8 : i32
    %152 = arith.muli %c6_i32_78, %c8_i32_79 : i32
    %153 = tpu.assume_multiple %152, 8 : i32
    %154 = arith.index_cast %153 : i32 to index
    %c0_80 = arith.constant 0 : index
    %155 = vector.load %arg10[%154, %c0_80] : memref<64x32xf32, #tpu.memory_space<vmem>>, vector<8x32xf32>
    %156 = arith.truncf %151 : vector<8x32xf32> to vector<8x32xbf16>
    %cst_81 = arith.constant dense<0.000000e+00> : vector<8x32xf32>
    %157 = tpu.matmul %156, %95, %cst_81 {dimension_numbers = #tpu.dot_dimension_numbers<[1], [0], [0], [1], [0, 0, 1, 1], [], []>} : vector<8x32xbf16>, vector<32x32xbf16>, vector<8x32xf32> -> vector<8x32xf32>
    %158 = arith.addf %155, %157 : vector<8x32xf32>
    %159 = math.tanh %158 : vector<8x32xf32>
    %c7_i32_82 = arith.constant 7 : i32
    %c8_i32_83 = arith.constant 8 : i32
    %160 = arith.muli %c7_i32_82, %c8_i32_83 : i32
    %161 = tpu.assume_multiple %160, 8 : i32
    %162 = arith.index_cast %161 : i32 to index
    %c0_84 = arith.constant 0 : index
    %163 = vector.load %arg10[%162, %c0_84] : memref<64x32xf32, #tpu.memory_space<vmem>>, vector<8x32xf32>
    %164 = arith.truncf %159 : vector<8x32xf32> to vector<8x32xbf16>
    %cst_85 = arith.constant dense<0.000000e+00> : vector<8x32xf32>
    %165 = tpu.matmul %164, %95, %cst_85 {dimension_numbers = #tpu.dot_dimension_numbers<[1], [0], [0], [1], [0, 0, 1, 1], [], []>} : vector<8x32xbf16>, vector<32x32xbf16>, vector<8x32xf32> -> vector<8x32xf32>
    %166 = arith.addf %163, %165 : vector<8x32xf32>
    %167 = math.tanh %166 : vector<8x32xf32>
    %c8_i32_86 = arith.constant 8 : i32
    %168 = arith.truncf %167 : vector<8x32xf32> to vector<8x32xbf16>
    %c0_87 = arith.constant 0 : index
    %c0_88 = arith.constant 0 : index
    %169 = vector.load %arg7[%c0_87, %c0_88] : memref<32x128xf32, #tpu.memory_space<vmem>>, vector<32x128xf32>
    %170 = arith.truncf %169 : vector<32x128xf32> to vector<32x128xbf16>
    %cst_89 = arith.constant dense<0.000000e+00> : vector<8x128xf32>
    %171 = tpu.matmul %168, %170, %cst_89 {dimension_numbers = #tpu.dot_dimension_numbers<[1], [0], [0], [1], [0, 0, 1, 1], [], []>} : vector<8x32xbf16>, vector<32x128xbf16>, vector<8x128xf32> -> vector<8x128xf32>
    %c0_90 = arith.constant 0 : index
    %c0_91 = arith.constant 0 : index
    %172 = vector.load %arg8[%c0_90, %c0_91] : memref<1x128xf32, #tpu.memory_space<vmem>>, vector<1x128xf32>
    %173 = vector.broadcast %172 : vector<1x128xf32> to vector<8x128xf32>
    %174 = arith.addf %171, %173 : vector<8x128xf32>
    %cst_92 = arith.constant 0.000000e+00 : f32
    %175 = vector.broadcast %cst_92 : f32 to vector<8x128xf32>
    %176 = arith.maximumf %174, %175 : vector<8x128xf32>
    %177 = tpu.iota {dimensions = array<i32: 1>} : vector<8x128xi32>
    %c8_i32_93 = arith.constant 8 : i32
    %178 = vector.broadcast %c8_i32_93 : i32 to vector<8x128xi32>
    %179 = arith.cmpi slt, %177, %178 : vector<8x128xi32>
    %cst_94 = arith.constant -1.000000e+30 : f32
    %180 = vector.broadcast %cst_94 : f32 to vector<8x128xf32>
    %181 = arith.select %179, %176, %180 : vector<8x128xi1>, vector<8x128xf32>
    %cst_95 = arith.constant dense<0xFF800000> : vector<8xf32>
    %182 = vector.multi_reduction <maximumf>, %181, %cst_95 [1] : vector<8x128xf32> to vector<8xf32>
    %183 = vector.shape_cast %182 : vector<8xf32> to vector<8x1xf32>
    %184 = vector.broadcast %183 : vector<8x1xf32> to vector<8x128xf32>
    %185 = arith.subf %181, %184 : vector<8x128xf32>
    %186 = math.exp %185 : vector<8x128xf32>
    %cst_96 = arith.constant dense<0.000000e+00> : vector<8xf32>
    %187 = vector.multi_reduction <add>, %186, %cst_96 [1] : vector<8x128xf32> to vector<8xf32>
    %188 = vector.shape_cast %187 : vector<8xf32> to vector<8x1xf32>
    %189 = tpu.reciprocal %188 {approx = true} : vector<8x1xf32> -> vector<8x1xf32>
    %190 = vector.broadcast %189 : vector<8x1xf32> to vector<8x128xf32>
    %191 = arith.mulf %186, %190 : vector<8x128xf32>
    %c0_97 = arith.constant 0 : index
    %c0_98 = arith.constant 0 : index
    %192 = vector.load %arg9[%c0_97, %c0_98] : memref<8x128xf32, #tpu.memory_space<vmem>>, vector<8x128xf32>
    tpu.vector_store %arg9[%c0_97, %c0_98], %191 {strides = array<i32>} : memref<8x128xf32, #tpu.memory_space<vmem>>, vector<8x128xf32>,
    return
  }
}

</mosaic_0001>

<llo_original>
// kernel: tpu_custom_call.1
$region0: #{tpu_custom_call.1}
  #allocation0 [shape = 'u32[]', space=smem, size = 0x4, offset = 0x4, fixed_abs, tag = 'smem constant byte address 0x4 - core index']
  #allocation1 [shape = 'u32[72,128]{1,0:T(1,128)}', space=vmem, size = 0x9000, scoped, tag = 'internal scratch']
  #allocation2 [shape = 'f32[64,32]{1,0:T(8,128)}', space=vmem, size = 0x8000, scoped, tag = 'scratch operand']
  %s0 = inlined_call_operand.vmem [shape: f32[64,16], index: 0, kind: input, shape index: {}]
  %s1 = inlined_call_operand.vmem [shape: f32[16,32], index: 1, kind: input, shape index: {}]
  %s2 = inlined_call_operand.vmem [shape: f32[32,32], index: 2, kind: input, shape index: {}]
  %s3 = inlined_call_operand.vmem [shape: f32[1,32], index: 3, kind: input, shape index: {}]
  %s4 = inlined_call_operand.vmem [shape: f32[32,32], index: 4, kind: input, shape index: {}]
  %s5 = inlined_call_operand.hbm [shape: f32[32,32], index: 5, kind: input, shape index: {}]
  %s6 = inlined_call_operand.vmem [shape: f32[1,32], index: 6, kind: input, shape index: {}]
  %s7 = inlined_call_operand.hbm [shape: f32[32,128], index: 7, kind: input, shape index: {}]
  %s8 = inlined_call_operand.vmem [shape: f32[1,128], index: 8, kind: input, shape index: {}]
  %s9 = inlined_call_operand.hbm [shape: f32[8,128], index: 9, kind: output, shape index: {}]
  %s10 = sld [smem:[#allocation0]]
  $region54: #{tpu_custom_call.1} parent=0
    _
  %s12 = ssub.s32 1, %s10
  %s13 = scalar_select 0, %s12, %s10
  $region1: #{tpu_custom_call.1} parent=0
    #allocation3 [shape = 'u8[16384]{0}', space=vmem, size = 0x4000, scoped, tag = 'input window, operand 5, single buffered']
    #allocation4 [shape = 's32[1]{0}', space=sflag, size = 0x4, scoped, tag = 'scoped memory for tpu_custom_call.1']
    #allocation5 [shape = 's32[1]{0}', space=sflag, size = 0x4, scoped, tag = 'scoped memory for tpu_custom_call.1']
    #allocation6 [shape = 'u8[16384]{0}', space=vmem, size = 0x4000, scoped, tag = 'input window, operand 7, single buffered']
    #allocation7 [shape = 's32[1]{0}', space=sflag, size = 0x4, scoped, tag = 'scoped memory for tpu_custom_call.1']
    #allocation8 [shape = 'u8[4096]{0}', space=vmem, size = 0x1000, scoped, tag = 'output window, operand 0, single buffered']
    %14 = vsyncpa [#allocation4], 0
    %15 = vsyncpa [#allocation7], 0
    %16 = vsyncpa [#allocation5], 0
    // Predicated region
    $region2: #{tpu_custom_call.1} parent=1 // pred_check
      _
    $region3: #{tpu_custom_call.1} parent=1 // pred_check_branch
      %18 = sbr.rel (0) target = $region5
    $region4: #{tpu_custom_call.1} parent=1 // pred_region
      _
    $region5: #{tpu_custom_call.1} parent=1 // pred_fallthru
      _
    // Predicated region
    $region6: #{tpu_custom_call.1} parent=1 // pred_check
      _
    $region7: #{tpu_custom_call.1} parent=1 // pred_check_branch
      %20 = sbr.rel (0) target = $region9
    $region8: #{tpu_custom_call.1} parent=1 // pred_region
      _
    $region9: #{tpu_custom_call.1} parent=1 // pred_fallthru
      _
    // Predicated region
    $region10: #{tpu_custom_call.1} parent=1 // pred_check
      _
    $region11: #{tpu_custom_call.1} parent=1 // pred_check_branch
      %22 = sbr.rel (0) target = $region13
    $region12: #{tpu_custom_call.1} parent=1 // pred_region
      _
    $region13: #{tpu_custom_call.1} parent=1 // pred_fallthru
      _
    // Predicated region
    $region14: #{tpu_custom_call.1} parent=1 // pred_check
      _
    $region15: #{tpu_custom_call.1} parent=1 // pred_check_branch
      %24 = sbr.rel (0) target = $region17
    $region16: #{tpu_custom_call.1} parent=1 // pred_region
      _
    $region17: #{tpu_custom_call.1} parent=1 // pred_fallthru
      _
    // Predicated region
    $region18: #{tpu_custom_call.1} parent=1 // pred_check
      _
    $region19: #{tpu_custom_call.1} parent=1 // pred_check_branch
      %26 = sbr.rel (0) target = $region21
    $region20: #{tpu_custom_call.1} parent=1 // pred_region
      _
    $region21: #{tpu_custom_call.1} parent=1 // pred_fallthru
      _
    // Predicated region
    $region22: #{tpu_custom_call.1} parent=1 // pred_check
      _
    $region23: #{tpu_custom_call.1} parent=1 // pred_check_branch
      %28 = sbr.rel (0) target = $region25
    $region24: #{tpu_custom_call.1} parent=1 // pred_region
      %30 = vsyncadd [#allocation4], 0
      %s31 = sshll.u32 %s5, 4
      %s32 = int_to_ptr.hbm [resolvable:$true] %s31
      %s33 = sshll.u32 [#allocation3], 4
      %s34 = int_to_ptr.vmem [resolvable:$true] %s33
      %39 = dma.hbm_to_vmem [thread:$0]  %s32, 512, %s34, [#allocation4], 128, 128, 8
    $region25: #{tpu_custom_call.1} parent=1 // pred_fallthru
      _
    // Predicated region
    $region26: #{tpu_custom_call.1} parent=1 // pred_check
      _
    $region27: #{tpu_custom_call.1} parent=1 // pred_check_branch
      %41 = sbr.rel (0) target = $region29
    $region28: #{tpu_custom_call.1} parent=1 // pred_region
      _
    $region29: #{tpu_custom_call.1} parent=1 // pred_fallthru
      _
    // Predicated region
    $region30: #{tpu_custom_call.1} parent=1 // pred_check
      _
    $region31: #{tpu_custom_call.1} parent=1 // pred_check_branch
      %43 = sbr.rel (0) target = $region33
    $region32: #{tpu_custom_call.1} parent=1 // pred_region
      %45 = vsyncadd [#allocation7], 0
      %s46 = sshll.u32 %s7, 4
      %s47 = int_to_ptr.hbm [resolvable:$true] %s46
      %s48 = sshll.u32 [#allocation6], 4
      %s49 = int_to_ptr.vmem [resolvable:$true] %s48
      %54 = dma.hbm_to_vmem [thread:$0]  %s47, 512, %s49, [#allocation7], 128, 128, 8
    $region33: #{tpu_custom_call.1} parent=1 // pred_fallthru
      _
    // Predicated region
    $region34: #{tpu_custom_call.1} parent=1 // pred_check
      _
    $region35: #{tpu_custom_call.1} parent=1 // pred_check_branch
      %56 = sbr.rel (0) target = $region37
    $region36: #{tpu_custom_call.1} parent=1 // pred_region
      _
    $region37: #{tpu_custom_call.1} parent=1 // pred_fallthru
      _
    // Predicated region
    $region38: #{tpu_custom_call.1} parent=1 // pred_check
      _
    $region39: #{tpu_custom_call.1} parent=1 // pred_check_branch
      %58 = sbr.rel (0) target = $region41
    $region40: #{tpu_custom_call.1} parent=1 // pred_region
      %60 = dma.done [#allocation4], 512
    $region41: #{tpu_custom_call.1} parent=1 // pred_fallthru
      _
    // Predicated region
    $region42: #{tpu_custom_call.1} parent=1 // pred_check
      _
    $region43: #{tpu_custom_call.1} parent=1 // pred_check_branch
      %62 = sbr.rel (0) target = $region45
    $region44: #{tpu_custom_call.1} parent=1 // pred_region
      %64 = dma.done [#allocation7], 512
    $region45: #{tpu_custom_call.1} parent=1 // pred_fallthru
      _
    %v66 = vld [vmem:[%s1] sm:$0xff]
    %v67 = vld [vmem:[%s1 + $0x8] sm:$0xff]
    %v68 = vpack.c.bf16 %v67, %v66
    %v69 = vld [vmem:[%s2] sm:$0xff]
    %v70 = vld [vmem:[%s2 + $0x8] sm:$0xff]
    %v71 = vld [vmem:[%s2 + $0x10] sm:$0xff]
    %v72 = vld [vmem:[%s2 + $0x18] sm:$0xff]
    %v73 = vpack.c.bf16 %v70, %v69
    %v74 = vpack.c.bf16 %v72, %v71
    %v75 = vld [vmem:[%s3] sm:$0x1]
    %v76 = vld [vmem:[%s0] sm:$0xff]
    %v77 = vld [vmem:[%s0 + $0x8] sm:$0xff]
    %v78 = vld [vmem:[%s0 + $0x10] sm:$0xff]
    %v79 = vld [vmem:[%s0 + $0x18] sm:$0xff]
    %v80 = vld [vmem:[%s0 + $0x20] sm:$0xff]
    %v81 = vld [vmem:[%s0 + $0x28] sm:$0xff]
    %v82 = vld [vmem:[%s0 + $0x30] sm:$0xff]
    %v83 = vld [vmem:[%s0 + $0x38] sm:$0xff]
    %v84 = vpack.c.bf16 %v77, %v76
    %v85 = vpack.c.bf16 %v79, %v78
    %v86 = vpack.c.bf16 %v81, %v80
    %v87 = vpack.c.bf16 %v83, %v82
    %v89 = vperm.slane %v75, 0
    %vm91 = vcmask 130048
    %v93 = vsel %vm91, %v84, 0
    %v96 = vsel %vm91, %v85, 0
    %v99 = vsel %vm91, %v86, 0
    %v102 = vsel %vm91, %v87, 0
    %104 = vmatpush.bf16.msra.mxu0 0
    %105 = vmatpush.bf16.msra.mxu0 0
    %106 = vmatpush.bf16.msra.mxu0 0
    %107 = vmatpush.bf16.msra.mxu0 0
    %108 = vmatpush.bf16.msra.mxu0 0
    %109 = vmatpush.bf16.msra.mxu0 0
    %110 = vmatpush.bf16.msra.mxu0 0
    %111 = vmatpush.bf16.msra.mxu0 %v68
    %112 = vmatmul.bf16.gmra.mxu0 %v93
    %v113 = vpop.f32.mrf.mxu0
    %v114 = vadd.f32 %v89, %v113
    %v115 = vpop.f32.mrf.mxu0
    %v116 = vadd.f32 %v89, %v115
    %117 = vmatmul.bf16.gmra.mxu0 %v96
    %v118 = vpop.f32.mrf.mxu0
    %v119 = vadd.f32 %v89, %v118
    %v120 = vpop.f32.mrf.mxu0
    %v121 = vadd.f32 %v89, %v120
    %122 = vmatmul.bf16.gmra.mxu0 %v99
    %v123 = vpop.f32.mrf.mxu0
    %v124 = vadd.f32 %v89, %v123
    %v125 = vpop.f32.mrf.mxu0
    %v126 = vadd.f32 %v89, %v125
    %127 = vmatmul.bf16.gmra.mxu0 %v102
    %v128 = vpop.f32.mrf.mxu0
    %v129 = vadd.f32 %v89, %v128
    %v130 = vpop.f32.mrf.mxu0
    %v131 = vadd.f32 %v89, %v130
    %132 = vdwg.mxu0
    %vm133 = vcmask 261120
    %134 = vst.msk [vmem:[#allocation2] sm:$0xff] %vm133, %v114
    %135 = vst.msk [vmem:[#allocation2 + $0x8] sm:$0xff] %vm133, %v116
    %136 = vst.msk [vmem:[#allocation2 + $0x10] sm:$0xff] %vm133, %v119
    %137 = vst.msk [vmem:[#allocation2 + $0x18] sm:$0xff] %vm133, %v121
    %138 = vst.msk [vmem:[#allocation2 + $0x20] sm:$0xff] %vm133, %v124
    %139 = vst.msk [vmem:[#allocation2 + $0x28] sm:$0xff] %vm133, %v126
    %140 = vst.msk [vmem:[#allocation2 + $0x30] sm:$0xff] %vm133, %v129
    %141 = vst.msk [vmem:[#allocation2 + $0x38] sm:$0xff] %vm133, %v131
    %v142 = vld [vmem:[#allocation2] sm:$0xff]
    %v144 = vsel %vm133, 0, 0
    %146 = vmatpush.bf16.msra.mxu0 0
    %147 = vmatpush.bf16.msra.mxu0 0
    %148 = vmatpush.bf16.msra.mxu0 0
    %149 = vmatpush.bf16.msra.mxu0 0
    %150 = vmatpush.bf16.msra.mxu0 0
    %151 = vmatpush.bf16.msra.mxu0 0
    %152 = vmatpush.bf16.msra.mxu0 %v74
    %153 = vmatpush.bf16.msra.mxu0 %v73
    %154 = vmatmul.bf16.gmra.mxu0 %v144
    %v155 = vpop.f32.mrf.mxu0
    %v156 = vadd.f32 0.0, %v155
    %v157 = vpop.f32.mrf.mxu0
    %158 = vdwg.mxu0
    %v159 = vadd.f32 %v142, %v156
    %v160 = vtanh.pop %v159
    %161 = vst.msk [vmem:[#allocation2] sm:$0xff] %vm133, %v160
    %s162 = scalar_lea.vmem [#allocation2], 8
    %v163 = vld [vmem:[%s162] sm:$0xff]
    %v164 = vpack.c.bf16 %v160, %v160
    %v166 = vsel %vm133, %v164, 0
    %168 = vmatpush.bf16.msra.mxu0 0
    %169 = vmatpush.bf16.msra.mxu0 0
    %170 = vmatpush.bf16.msra.mxu0 0
    %171 = vmatpush.bf16.msra.mxu0 0
    %172 = vmatpush.bf16.msra.mxu0 0
    %173 = vmatpush.bf16.msra.mxu0 0
    %174 = vmatpush.bf16.msra.mxu0 %v74
    %175 = vmatpush.bf16.msra.mxu0 %v73
    %176 = vmatmul.bf16.gmra.mxu0 %v166
    %v177 = vpop.f32.mrf.mxu0
    %v178 = vadd.f32 0.0, %v177
    %v179 = vpop.f32.mrf.mxu0
    %180 = vdwg.mxu0
    %v181 = vadd.f32 %v163, %v178
    %v182 = vtanh.pop %v181
    %183 = vst.msk [vmem:[%s162] sm:$0xff] %vm133, %v182
    %s184 = scalar_lea.vmem [#allocation2], 16
    %v185 = vld [vmem:[%s184] sm:$0xff]
    %v186 = vpack.c.bf16 %v182, %v182
    %v188 = vsel %vm133, %v186, 0
    %190 = vmatpush.bf16.msra.mxu0 0
    %191 = vmatpush.bf16.msra.mxu0 0
    %192 = vmatpush.bf16.msra.mxu0 0
    %193 = vmatpush.bf16.msra.mxu0 0
    %194 = vmatpush.bf16.msra.mxu0 0
    %195 = vmatpush.bf16.msra.mxu0 0
    %196 = vmatpush.bf16.msra.mxu0 %v74
    %197 = vmatpush.bf16.msra.mxu0 %v73
    %198 = vmatmul.bf16.gmra.mxu0 %v188
    %v199 = vpop.f32.mrf.mxu0
    %v200 = vadd.f32 0.0, %v199
    %v201 = vpop.f32.mrf.mxu0
    %202 = vdwg.mxu0
    %v203 = vadd.f32 %v185, %v200
    %v204 = vtanh.pop %v203
    %205 = vst.msk [vmem:[%s184] sm:$0xff] %vm133, %v204
    %s206 = scalar_lea.vmem [#allocation2], 24
    %v207 = vld [vmem:[%s206] sm:$0xff]
    %v208 = vpack.c.bf16 %v204, %v204
    %v210 = vsel %vm133, %v208, 0
    %212 = vmatpush.bf16.msra.mxu0 0
    %213 = vmatpush.bf16.msra.mxu0 0
    %214 = vmatpush.bf16.msra.mxu0 0
    %215 = vmatpush.bf16.msra.mxu0 0
    %216 = vmatpush.bf16.msra.mxu0 0
    %217 = vmatpush.bf16.msra.mxu0 0
    %218 = vmatpush.bf16.msra.mxu0 %v74
    %219 = vmatpush.bf16.msra.mxu0 %v73
    %220 = vmatmul.bf16.gmra.mxu0 %v210
    %v221 = vpop.f32.mrf.mxu0
    %v222 = vadd.f32 0.0, %v221
    %v223 = vpop.f32.mrf.mxu0
    %224 = vdwg.mxu0
    %v225 = vadd.f32 %v207, %v222
    %v226 = vtanh.pop %v225
    %227 = vst.msk [vmem:[%s206] sm:$0xff] %vm133, %v226
    %s228 = scalar_lea.vmem [#allocation2], 32
    %v229 = vld [vmem:[%s228] sm:$0xff]
    %v230 = vpack.c.bf16 %v226, %v226
    %v232 = vsel %vm133, %v230, 0
    %234 = vmatpush.bf16.msra.mxu0 0
    %235 = vmatpush.bf16.msra.mxu0 0
    %236 = vmatpush.bf16.msra.mxu0 0
    %237 = vmatpush.bf16.msra.mxu0 0
    %238 = vmatpush.bf16.msra.mxu0 0
    %239 = vmatpush.bf16.msra.mxu0 0
    %240 = vmatpush.bf16.msra.mxu0 %v74
    %241 = vmatpush.bf16.msra.mxu0 %v73
    %242 = vmatmul.bf16.gmra.mxu0 %v232
    %v243 = vpop.f32.mrf.mxu0
    %v244 = vadd.f32 0.0, %v243
    %v245 = vpop.f32.mrf.mxu0
    %246 = vdwg.mxu0
    %v247 = vadd.f32 %v229, %v244
    %v248 = vtanh.pop %v247
    %249 = vst.msk [vmem:[%s228] sm:$0xff] %vm133, %v248
    %s250 = scalar_lea.vmem [#allocation2], 40
    %v251 = vld [vmem:[%s250] sm:$0xff]
    %v252 = vpack.c.bf16 %v248, %v248
    %v254 = vsel %vm133, %v252, 0
    %256 = vmatpush.bf16.msra.mxu0 0
    %257 = vmatpush.bf16.msra.mxu0 0
    %258 = vmatpush.bf16.msra.mxu0 0
    %259 = vmatpush.bf16.msra.mxu0 0
    %260 = vmatpush.bf16.msra.mxu0 0
    %261 = vmatpush.bf16.msra.mxu0 0
    %262 = vmatpush.bf16.msra.mxu0 %v74
    %263 = vmatpush.bf16.msra.mxu0 %v73
    %264 = vmatmul.bf16.gmra.mxu0 %v254
    %v265 = vpop.f32.mrf.mxu0
    %v266 = vadd.f32 0.0, %v265
    %v267 = vpop.f32.mrf.mxu0
    %268 = vdwg.mxu0
    %v269 = vadd.f32 %v251, %v266
    %v270 = vtanh.pop %v269
    %271 = vst.msk [vmem:[%s250] sm:$0xff] %vm133, %v270
    %s272 = scalar_lea.vmem [#allocation2], 48
    %v273 = vld [vmem:[%s272] sm:$0xff]
    %v274 = vpack.c.bf16 %v270, %v270
    %v276 = vsel %vm133, %v274, 0
    %278 = vmatpush.bf16.msra.mxu0 0
    %279 = vmatpush.bf16.msra.mxu0 0
    %280 = vmatpush.bf16.msra.mxu0 0
    %281 = vmatpush.bf16.msra.mxu0 0
    %282 = vmatpush.bf16.msra.mxu0 0
    %283 = vmatpush.bf16.msra.mxu0 0
    %284 = vmatpush.bf16.msra.mxu0 %v74
    %285 = vmatpush.bf16.msra.mxu0 %v73
    %286 = vmatmul.bf16.gmra.mxu0 %v276
    %v287 = vpop.f32.mrf.mxu0
    %v288 = vadd.f32 0.0, %v287
    %v289 = vpop.f32.mrf.mxu0
    %290 = vdwg.mxu0
    %v291 = vadd.f32 %v273, %v288
    %v292 = vtanh.pop %v291
    %293 = vst.msk [vmem:[%s272] sm:$0xff] %vm133, %v292
    %s294 = scalar_lea.vmem [#allocation2], 56
    %v295 = vld [vmem:[%s294] sm:$0xff]
    %v296 = vpack.c.bf16 %v292, %v292
    %v298 = vsel %vm133, %v296, 0
    %300 = vmatpush.bf16.msra.mxu0 0
    %301 = vmatpush.bf16.msra.mxu0 0
    %302 = vmatpush.bf16.msra.mxu0 0
    %303 = vmatpush.bf16.msra.mxu0 0
    %304 = vmatpush.bf16.msra.mxu0 0
    %305 = vmatpush.bf16.msra.mxu0 0
    %306 = vmatpush.bf16.msra.mxu0 %v74
    %307 = vmatpush.bf16.msra.mxu0 %v73
    %308 = vmatmul.bf16.gmra.mxu0 %v298
    %v309 = vpop.f32.mrf.mxu0
    %v310 = vadd.f32 0.0, %v309
    %v311 = vpop.f32.mrf.mxu0
    %312 = vdwg.mxu0
    %v313 = vadd.f32 %v295, %v310
    %v314 = vtanh.pop %v313
    %315 = vst.msk [vmem:[%s294] sm:$0xff] %vm133, %v314
    %v316 = vld [vmem:[%s4] sm:$0xff]
    %v317 = vld [vmem:[%s4 + $0x8] sm:$0xff]
    %v318 = vld [vmem:[%s4 + $0x10] sm:$0xff]
    %v319 = vld [vmem:[%s4 + $0x18] sm:$0xff]
    %v320 = vpack.c.bf16 %v317, %v316
    %v321 = vpack.c.bf16 %v319, %v318
    %v322 = vld [vmem:[#allocation3] sm:$0xff]
    %v323 = vld [vmem:[#allocation3 + $0x8] sm:$0xff]
    %v324 = vld [vmem:[#allocation3 + $0x10] sm:$0xff]
    %v325 = vld [vmem:[#allocation3 + $0x18] sm:$0xff]
    %v326 = vpack.c.bf16 %v323, %v322
    %v327 = vpack.c.bf16 %v325, %v324
    %v328 = vld [vmem:[%s6] sm:$0x1]
    %v329 = vld [vmem:[#allocation2] sm:$0xff]
    %v330 = vld [vmem:[#allocation2 + $0x8] sm:$0xff]
    %v331 = vld [vmem:[#allocation2 + $0x10] sm:$0xff]
    %v332 = vld [vmem:[#allocation2 + $0x18] sm:$0xff]
    %v333 = vld [vmem:[#allocation2 + $0x20] sm:$0xff]
    %v334 = vld [vmem:[#allocation2 + $0x28] sm:$0xff]
    %v335 = vld [vmem:[#allocation2 + $0x30] sm:$0xff]
    %v336 = vld [vmem:[#allocation2 + $0x38] sm:$0xff]
    %v337 = vpack.c.bf16 %v330, %v329
    %v338 = vpack.c.bf16 %v332, %v331
    %v339 = vpack.c.bf16 %v334, %v333
    %v340 = vpack.c.bf16 %v336, %v335
    %v342 = vperm.slane %v328, 0
    %v345 = vsel %vm133, %v337, 0
    %v348 = vsel %vm133, %v338, 0
    %v351 = vsel %vm133, %v339, 0
    %v354 = vsel %vm133, %v340, 0
    %356 = vmatpush.bf16.msra.mxu0 0
    %357 = vmatpush.bf16.msra.mxu0 0
    %358 = vmatpush.bf16.msra.mxu0 0
    %359 = vmatpush.bf16.msra.mxu0 0
    %360 = vmatpush.bf16.msra.mxu0 0
    %361 = vmatpush.bf16.msra.mxu0 0
    %362 = vmatpush.bf16.msra.mxu0 %v321
    %363 = vmatpush.bf16.msra.mxu0 %v320
    %364 = vmatmul.bf16.gmra.mxu0 %v345
    %v365 = vpop.f32.mrf.mxu0
    %v366 = vadd.f32 %v342, %v365
    %v367 = vpop.f32.mrf.mxu0
    %v368 = vadd.f32 %v342, %v367
    %369 = vmatmul.bf16.gmra.mxu0 %v348
    %v370 = vpop.f32.mrf.mxu0
    %v371 = vadd.f32 %v342, %v370
    %v372 = vpop.f32.mrf.mxu0
    %v373 = vadd.f32 %v342, %v372
    %374 = vmatmul.bf16.gmra.mxu0 %v351
    %v375 = vpop.f32.mrf.mxu0
    %v376 = vadd.f32 %v342, %v375
    %v377 = vpop.f32.mrf.mxu0
    %v378 = vadd.f32 %v342, %v377
    %379 = vmatmul.bf16.gmra.mxu0 %v354
    %v380 = vpop.f32.mrf.mxu0
    %v381 = vadd.f32 %v342, %v380
    %v382 = vpop.f32.mrf.mxu0
    %v383 = vadd.f32 %v342, %v382
    %384 = vdwg.mxu0
    %385 = vst.msk [vmem:[#allocation2] sm:$0xff] %vm133, %v366
    %386 = vst.msk [vmem:[#allocation2 + $0x8] sm:$0xff] %vm133, %v368
    %387 = vst.msk [vmem:[#allocation2 + $0x10] sm:$0xff] %vm133, %v371
    %388 = vst.msk [vmem:[#allocation2 + $0x18] sm:$0xff] %vm133, %v373
    %389 = vst.msk [vmem:[#allocation2 + $0x20] sm:$0xff] %vm133, %v376
    %390 = vst.msk [vmem:[#allocation2 + $0x28] sm:$0xff] %vm133, %v378
    %391 = vst.msk [vmem:[#allocation2 + $0x30] sm:$0xff] %vm133, %v381
    %392 = vst.msk [vmem:[#allocation2 + $0x38] sm:$0xff] %vm133, %v383
    %v393 = vld [vmem:[#allocation2] sm:$0xff]
    %394 = vmatpush.bf16.msra.mxu0 0
    %395 = vmatpush.bf16.msra.mxu0 0
    %396 = vmatpush.bf16.msra.mxu0 0
    %397 = vmatpush.bf16.msra.mxu0 0
    %398 = vmatpush.bf16.msra.mxu0 0
    %399 = vmatpush.bf16.msra.mxu0 0
    %400 = vmatpush.bf16.msra.mxu0 %v327
    %401 = vmatpush.bf16.msra.mxu0 %v326
    %402 = vmatmul.bf16.gmra.mxu0 %v144
    %v403 = vpop.f32.mrf.mxu0
    %v404 = vadd.f32 0.0, %v403
    %v405 = vpop.f32.mrf.mxu0
    %406 = vdwg.mxu0
    %v407 = vadd.f32 %v393, %v404
    %v408 = vtanh.pop %v407
    %v409 = vld [vmem:[%s162] sm:$0xff]
    %v410 = vpack.c.bf16 %v408, %v408
    %v412 = vsel %vm133, %v410, 0
    %414 = vmatpush.bf16.msra.mxu0 0
    %415 = vmatpush.bf16.msra.mxu0 0
    %416 = vmatpush.bf16.msra.mxu0 0
    %417 = vmatpush.bf16.msra.mxu0 0
    %418 = vmatpush.bf16.msra.mxu0 0
    %419 = vmatpush.bf16.msra.mxu0 0
    %420 = vmatpush.bf16.msra.mxu0 %v327
    %421 = vmatpush.bf16.msra.mxu0 %v326
    %422 = vmatmul.bf16.gmra.mxu0 %v412
    %v423 = vpop.f32.mrf.mxu0
    %v424 = vadd.f32 0.0, %v423
    %v425 = vpop.f32.mrf.mxu0
    %426 = vdwg.mxu0
    %v427 = vadd.f32 %v409, %v424
    %v428 = vtanh.pop %v427
    %v429 = vld [vmem:[%s184] sm:$0xff]
    %v430 = vpack.c.bf16 %v428, %v428
    %v432 = vsel %vm133, %v430, 0
    %434 = vmatpush.bf16.msra.mxu0 0
    %435 = vmatpush.bf16.msra.mxu0 0
    %436 = vmatpush.bf16.msra.mxu0 0
    %437 = vmatpush.bf16.msra.mxu0 0
    %438 = vmatpush.bf16.msra.mxu0 0
    %439 = vmatpush.bf16.msra.mxu0 0
    %440 = vmatpush.bf16.msra.mxu0 %v327
    %441 = vmatpush.bf16.msra.mxu0 %v326
    %442 = vmatmul.bf16.gmra.mxu0 %v432
    %v443 = vpop.f32.mrf.mxu0
    %v444 = vadd.f32 0.0, %v443
    %v445 = vpop.f32.mrf.mxu0
    %446 = vdwg.mxu0
    %v447 = vadd.f32 %v429, %v444
    %v448 = vtanh.pop %v447
    %v449 = vld [vmem:[%s206] sm:$0xff]
    %v450 = vpack.c.bf16 %v448, %v448
    %v452 = vsel %vm133, %v450, 0
    %454 = vmatpush.bf16.msra.mxu0 0
    %455 = vmatpush.bf16.msra.mxu0 0
    %456 = vmatpush.bf16.msra.mxu0 0
    %457 = vmatpush.bf16.msra.mxu0 0
    %458 = vmatpush.bf16.msra.mxu0 0
    %459 = vmatpush.bf16.msra.mxu0 0
    %460 = vmatpush.bf16.msra.mxu0 %v327
    %461 = vmatpush.bf16.msra.mxu0 %v326
    %462 = vmatmul.bf16.gmra.mxu0 %v452
    %v463 = vpop.f32.mrf.mxu0
    %v464 = vadd.f32 0.0, %v463
    %v465 = vpop.f32.mrf.mxu0
    %466 = vdwg.mxu0
    %v467 = vadd.f32 %v449, %v464
    %v468 = vtanh.pop %v467
    %v469 = vld [vmem:[%s228] sm:$0xff]
    %v470 = vpack.c.bf16 %v468, %v468
    %v472 = vsel %vm133, %v470, 0
    %474 = vmatpush.bf16.msra.mxu0 0
    %475 = vmatpush.bf16.msra.mxu0 0
    %476 = vmatpush.bf16.msra.mxu0 0
    %477 = vmatpush.bf16.msra.mxu0 0
    %478 = vmatpush.bf16.msra.mxu0 0
    %479 = vmatpush.bf16.msra.mxu0 0
    %480 = vmatpush.bf16.msra.mxu0 %v327
    %481 = vmatpush.bf16.msra.mxu0 %v326
    %482 = vmatmul.bf16.gmra.mxu0 %v472
    %v483 = vpop.f32.mrf.mxu0
    %v484 = vadd.f32 0.0, %v483
    %v485 = vpop.f32.mrf.mxu0
    %486 = vdwg.mxu0
    %v487 = vadd.f32 %v469, %v484
    %v488 = vtanh.pop %v487
    %v489 = vld [vmem:[%s250] sm:$0xff]
    %v490 = vpack.c.bf16 %v488, %v488
    %v492 = vsel %vm133, %v490, 0
    %494 = vmatpush.bf16.msra.mxu0 0
    %495 = vmatpush.bf16.msra.mxu0 0
    %496 = vmatpush.bf16.msra.mxu0 0
    %497 = vmatpush.bf16.msra.mxu0 0
    %498 = vmatpush.bf16.msra.mxu0 0
    %499 = vmatpush.bf16.msra.mxu0 0
    %500 = vmatpush.bf16.msra.mxu0 %v327
    %501 = vmatpush.bf16.msra.mxu0 %v326
    %502 = vmatmul.bf16.gmra.mxu0 %v492
    %v503 = vpop.f32.mrf.mxu0
    %v504 = vadd.f32 0.0, %v503
    %v505 = vpop.f32.mrf.mxu0
    %506 = vdwg.mxu0
    %v507 = vadd.f32 %v489, %v504
    %v508 = vtanh.pop %v507
    %v509 = vld [vmem:[%s272] sm:$0xff]
    %v510 = vpack.c.bf16 %v508, %v508
    %v512 = vsel %vm133, %v510, 0
    %514 = vmatpush.bf16.msra.mxu0 0
    %515 = vmatpush.bf16.msra.mxu0 0
    %516 = vmatpush.bf16.msra.mxu0 0
    %517 = vmatpush.bf16.msra.mxu0 0
    %518 = vmatpush.bf16.msra.mxu0 0
    %519 = vmatpush.bf16.msra.mxu0 0
    %520 = vmatpush.bf16.msra.mxu0 %v327
    %521 = vmatpush.bf16.msra.mxu0 %v326
    %522 = vmatmul.bf16.gmra.mxu0 %v512
    %v523 = vpop.f32.mrf.mxu0
    %v524 = vadd.f32 0.0, %v523
    %v525 = vpop.f32.mrf.mxu0
    %526 = vdwg.mxu0
    %v527 = vadd.f32 %v509, %v524
    %v528 = vtanh.pop %v527
    %v529 = vld [vmem:[%s294] sm:$0xff]
    %v530 = vpack.c.bf16 %v528, %v528
    %v532 = vsel %vm133, %v530, 0
    %534 = vmatpush.bf16.msra.mxu0 0
    %535 = vmatpush.bf16.msra.mxu0 0
    %536 = vmatpush.bf16.msra.mxu0 0
    %537 = vmatpush.bf16.msra.mxu0 0
    %538 = vmatpush.bf16.msra.mxu0 0
    %539 = vmatpush.bf16.msra.mxu0 0
    %540 = vmatpush.bf16.msra.mxu0 %v327
    %541 = vmatpush.bf16.msra.mxu0 %v326
    %542 = vmatmul.bf16.gmra.mxu0 %v532
    %v543 = vpop.f32.mrf.mxu0
    %v544 = vadd.f32 0.0, %v543
    %v545 = vpop.f32.mrf.mxu0
    %546 = vdwg.mxu0
    %v547 = vadd.f32 %v529, %v544
    %v548 = vtanh.pop %v547
    %v549 = vpack.c.bf16 %v548, %v548
    %v550 = vld [vmem:[#allocation6] sm:$0xff]
    %v551 = vld [vmem:[#allocation6 + $0x8] sm:$0xff]
    %v552 = vld [vmem:[#allocation6 + $0x10] sm:$0xff]
    %v553 = vld [vmem:[#allocation6 + $0x18] sm:$0xff]
    %v554 = vpack.c.bf16 %v551, %v550
    %v555 = vpack.c.bf16 %v553, %v552
    %v556 = vld [vmem:[%s8] sm:$0x1]
    %v558 = vperm.slane %v556, 0
    %v561 = vsel %vm133, %v549, 0
    %563 = vmatpush.bf16.msra.mxu0 0
    %564 = vmatpush.bf16.msra.mxu0 0
    %565 = vmatpush.bf16.msra.mxu0 0
    %566 = vmatpush.bf16.msra.mxu0 0
    %567 = vmatpush.bf16.msra.mxu0 0
    %568 = vmatpush.bf16.msra.mxu0 0
    %569 = vmatpush.bf16.msra.mxu0 %v555
    %570 = vmatpush.bf16.msra.mxu0 %v554
    %571 = vmatmul.bf16.gmra.mxu0 %v561
    %v572 = vpop.f32.mrf.mxu0
    %v573 = vadd.f32 %v558, %v572
    %v574 = vpop.f32.mrf.mxu0
    %575 = vdwg.mxu0
    %v576 = vmax.f32 %v573, 0.0
    %v577 = vlaneseq
    %v578 = vand.u32 %v577, 127
    %vm579 = vcmp.lt.s32.totalorder %v578, 8
    %v580 = vsel %vm579, %v576, -1e+30
    %581 = vmax.xlane.f32.xlu0 %v580
    %v582 = vpop.xlane.xlu0 %581
    %v583 = vsub.f32 %v580, %v582
    %v584 = vmul.f32 %v583, 1.442695
    %v585 = vpow.pop %v584
    %586 = vadd.xlane.f32.xlu0 %v585
    %v587 = vpop.xlane.xlu0 %586
    %v588 = vrcp.pop %v587
    %v589 = vmul.f32 %v585, %v588
    %590 = vst [vmem:[#allocation8] sm:$0xff] %v589
    // Predicated region
    $region46: #{tpu_custom_call.1} parent=1 // pred_check
      _
    $region47: #{tpu_custom_call.1} parent=1 // pred_check_branch
      %592 = sbr.rel (0) target = $region49
    $region48: #{tpu_custom_call.1} parent=1 // pred_region
      %594 = vsyncadd [#allocation5], 0
      %s596 = sshll.u32 [#allocation8], 4
      %s597 = int_to_ptr.vmem [resolvable:$true] %s596
      %s598 = sshll.u32 %s9, 4
      %s599 = int_to_ptr.hbm [resolvable:$true] %s598
      %601 = dma.vmem_to_hbm [thread:$0]  %s597, 128, %s599, [#allocation5]
    $region49: #{tpu_custom_call.1} parent=1 // pred_fallthru
      _
    // Predicated region
    $region50: #{tpu_custom_call.1} parent=1 // pred_check
      _
    $region51: #{tpu_custom_call.1} parent=1 // pred_check_branch
      %603 = sbr.rel (0) target = $region53
    $region52: #{tpu_custom_call.1} parent=1 // pred_region
      %605 = dma.done [#allocation5], 128
    $region53: #{tpu_custom_call.1} parent=1 // pred_fallthru
      _
    %606 = vsyncpa [#allocation4], 1
    %607 = vsyncpa [#allocation7], 1
    %608 = vsyncpa [#allocation5], 1

</llo_original>
